<compile_context>
chip_gen: v5e
topology: v5e:2x2
jax: 0.10.0
libtpu: 0.0.40
codegen_flags: <defaults>
</compile_context>

<pallas_src>
import jax
import jax.numpy as jnp
from jax import lax
from jax.experimental import pallas as pl
from jax.experimental.pallas import tpu as pltpu

EMBEDDING_DIM = 100
DOMAIN_EMBEDDING_DIM = 16
DOMAIN_VOCAB_SIZE = 1000
COMBINED_DIM = EMBEDDING_DIM + DOMAIN_EMBEDDING_DIM  # 116
H1, H2, H3, H4 = 64, 32, 16, 1

# Default batch tile.  Per grid step (double-buffered): title f32 ~3.3 MB x2,
# demb f32 ~0.5 MB x2, output 32 KB x2, weights tiny -> ~7.7 MB total, under
# every chip's default scoped-VMEM limit (16/32/32 MiB on v5e/v6e/v7x).
DEFAULT_BLOCK_B = 8192


def _round_up(x, m):
    return ((x + m - 1) // m) * m


def _make_kernel(has_domain):
    """MLP kernel; demb input is omitted entirely when has_domain is False."""

    def kernel(*refs):
        if has_domain:
            (title_ref, demb_ref, w1a_ref, w1b_ref, b1_ref,
             w2_ref, b2_ref, w3_ref, b3_ref, w4t_ref, b4_ref, o_ref) = refs
        else:
            (title_ref, w1a_ref, b1_ref,
             w2_ref, b2_ref, w3_ref, b3_ref, w4t_ref, b4_ref, o_ref) = refs

        # Inputs arrive f32 from HBM; cast to bf16 in VMEM so the MXU runs in
        # bf16 while avoiding any wrapper-side cast round-trip through HBM.
        h = jnp.dot(title_ref[...].astype(jnp.bfloat16), w1a_ref[...],
                    preferred_element_type=jnp.float32)                 # [TB,64]
        if has_domain:
            h = h + jnp.dot(demb_ref[...].astype(jnp.bfloat16), w1b_ref[...],
                            preferred_element_type=jnp.float32)
        h = jnp.maximum(h + b1_ref[...], 0.0).astype(jnp.bfloat16)      # [TB,64]

        h = jnp.dot(h, w2_ref[...], preferred_element_type=jnp.float32)
        h = jnp.maximum(h + b2_ref[...], 0.0).astype(jnp.bfloat16)      # [TB,32]

        h = jnp.dot(h, w3_ref[...], preferred_element_type=jnp.float32)
        h = jnp.maximum(h + b3_ref[...], 0.0)                           # [TB,16] f32

        # Final layer emitted lane-dense: [1,16] x [TB,16]^T -> [1,TB].
        out_row = lax.dot_general(
            w4t_ref[...], h,
            dimension_numbers=(((1,), (1,)), ((), ())),
            preferred_element_type=jnp.float32) + b4_ref[...]           # [1,TB]

        o_ref[...] = out_row.reshape(o_ref.shape).astype(o_ref.dtype)

    return kernel


def enhanced_regressor_forward(params, title_embedding, domain_id=None,
                               *, block_b=DEFAULT_BLOCK_B):
    """Pallas implementation of EnhancedRegressor.forward (returns f32 [B,1])."""
    emb_table = params["domain_embedding"]          # [vocab, 16]
    w1, b1 = params["w1"], params["b1"]             # [116,64], [1,64]
    w2, b2 = params["w2"], params["b2"]             # [64,32],  [1,32]
    w3, b3 = params["w3"], params["b3"]             # [32,16],  [1,16]
    w4, b4 = params["w4"], params["b4"]             # [16,1],   [1,1]

    B = title_embedding.shape[0]
    has_domain = domain_id is not None

    # Inputs stay f32 in HBM; the kernel casts to bf16 in VMEM.
    title = title_embedding.astype(jnp.float32)
    if has_domain:
        # Embedding gather kept as plain-JAX glue (tiny: 64 B/row).
        demb = jnp.take(emb_table.astype(jnp.float32), domain_id, axis=0)

    # Batch tiling (TB multiple of 8); pad B up to a multiple of TB.
    TB = min(block_b, _round_up(B, 8))
    Bp = _round_up(B, TB)
    if Bp != B:
        pad = Bp - B
        title = jnp.pad(title, ((0, pad), (0, 0)))
        if has_domain:
            demb = jnp.pad(demb, ((0, pad), (0, 0)))
    grid = pl.cdiv(Bp, TB)

    # Split fc1 so the concat never materializes; transpose fc4 to a row.
    w1a = w1[:EMBEDDING_DIM].astype(jnp.bfloat16)         # [100,64]
    w1b = w1[EMBEDDING_DIM:].astype(jnp.bfloat16)         # [16,64]
    w2b = w2.astype(jnp.bfloat16)
    w3b = w3.astype(jnp.bfloat16)
    w4t = w4.T.astype(jnp.float32)                        # [1,16]
    b1f, b2f, b3f, b4f = (b.astype(jnp.float32) for b in (b1, b2, b3, b4))

    const = lambda shape: pl.BlockSpec(shape, lambda i: (0,) * len(shape))

    in_specs = [pl.BlockSpec((TB, EMBEDDING_DIM), lambda i: (i, 0))]    # title tile
    operands = [title]
    if has_domain:
        in_specs.append(pl.BlockSpec((TB, DOMAIN_EMBEDDING_DIM), lambda i: (i, 0)))
        operands.append(demb)
        in_specs += [const((EMBEDDING_DIM, H1)), const((DOMAIN_EMBEDDING_DIM, H1))]
        operands += [w1a, w1b]
    else:
        in_specs += [const((EMBEDDING_DIM, H1))]
        operands += [w1a]
    in_specs += [const((1, H1)),
                 const((H1, H2)), const((1, H2)),
                 const((H2, H3)), const((1, H3)),
                 const((1, H3)), const((1, 1))]
    operands += [b1f, w2b, b2f, w3b, b3f, w4t, b4f]

    out_spec = pl.BlockSpec((1, 1, TB), lambda i: (i, 0, 0))            # lane-dense

    out3 = pl.pallas_call(
        _make_kernel(has_domain),
        out_shape=jax.ShapeDtypeStruct((grid, 1, TB), jnp.float32),
        grid=(grid,),
        in_specs=in_specs,
        out_specs=out_spec,
        compiler_params=pltpu.CompilerParams(
            dimension_semantics=("parallel",)),
    )(*operands)

    # (grid,1,TB) row-major flatten == batch order; drop padded rows.
    return out3.reshape(-1)[:B].reshape(B, 1)


def init_params(key):
    """Deterministic parameter init (shapes match the torch module)."""
    ks = jax.random.split(key, 9)

    def linear(kw, kb, fan_in, fan_out):
        bound = 1.0 / jnp.sqrt(jnp.float32(fan_in))
        w = jax.random.uniform(kw, (fan_in, fan_out), jnp.float32, -bound, bound)
        b = jax.random.uniform(kb, (1, fan_out), jnp.float32, -bound, bound)
        return w, b

    params = {}
    params["domain_embedding"] = jax.random.normal(
        ks[0], (DOMAIN_VOCAB_SIZE, DOMAIN_EMBEDDING_DIM), jnp.float32)
    params["w1"], params["b1"] = linear(ks[1], ks[2], COMBINED_DIM, H1)
    params["w2"], params["b2"] = linear(ks[3], ks[4], H1, H2)
    params["w3"], params["b3"] = linear(ks[5], ks[6], H2, H3)
    params["w4"], params["b4"] = linear(ks[7], ks[8], H3, H4)
    return params


def _reference_forward(params, title_embedding, domain_id=None):
    # Pure-JAX f32 reference matching the torch module.
    B = title_embedding.shape[0]
    if domain_id is not None:
        demb = jnp.take(params["domain_embedding"], domain_id, axis=0)
    else:
        demb = jnp.zeros((B, DOMAIN_EMBEDDING_DIM), title_embedding.dtype)
    x = jnp.concatenate([title_embedding, demb], axis=1).astype(jnp.float32)
    x = jnp.maximum(x @ params["w1"] + params["b1"], 0.0)
    x = jnp.maximum(x @ params["w2"] + params["b2"], 0.0)
    x = jnp.maximum(x @ params["w3"] + params["b3"], 0.0)
    return x @ params["w4"] + params["b4"]


if __name__ == "__main__":
    key = jax.random.PRNGKey(0)
    k_params, k_title, k_dom, k_title2, k_dom2 = jax.random.split(key, 5)

    params = init_params(k_params)

    # Small test (single tile), with and without domain_id.
    B = 8
    title_embedding = jax.random.normal(k_title, (B, EMBEDDING_DIM), jnp.float32)
    domain_id = jax.random.randint(k_dom, (B,), 0, DOMAIN_VOCAB_SIZE, jnp.int32)

    out = jax.block_until_ready(
        enhanced_regressor_forward(params, title_embedding, domain_id))
    ref = _reference_forward(params, title_embedding, domain_id)
    assert out.shape == (B, 1)
    # bf16 matmul inputs (f32 accumulation) -> loosened tolerance.
    assert jnp.allclose(out, ref, atol=5e-2, rtol=5e-2)

    out2 = jax.block_until_ready(
        enhanced_regressor_forward(params, title_embedding, None))
    ref2 = _reference_forward(params, title_embedding, None)
    assert out2.shape == (B, 1)
    assert jnp.allclose(out2, ref2, atol=5e-2, rtol=5e-2)

    # Multi-tile + ragged-batch path (grid=3, padded 300 -> 384) at small scale.
    B2 = 300
    title2 = jax.random.normal(k_title2, (B2, EMBEDDING_DIM), jnp.float32)
    dom2 = jax.random.randint(k_dom2, (B2,), 0, DOMAIN_VOCAB_SIZE, jnp.int32)
    out3 = jax.block_until_ready(
        enhanced_regressor_forward(params, title2, dom2, block_b=128))
    ref3 = _reference_forward(params, title2, dom2)
    assert out3.shape == (B2, 1)
    assert jnp.allclose(out3, ref3, atol=5e-2, rtol=5e-2)

    print("KERNEL_OK")
</pallas_src>

<mosaic_0001>
module attributes {stable_mosaic.version = 11 : i64} {
  func.func @kernel(%arg0: i32, %arg1: memref<8x100xf32, #tpu.memory_space<vmem>>, %arg2: memref<8x16xf32, #tpu.memory_space<vmem>>, %arg3: memref<100x64xbf16, #tpu.memory_space<vmem>>, %arg4: memref<16x64xbf16, #tpu.memory_space<vmem>>, %arg5: memref<1x64xf32, #tpu.memory_space<vmem>>, %arg6: memref<64x32xbf16, #tpu.memory_space<vmem>>, %arg7: memref<1x32xf32, #tpu.memory_space<vmem>>, %arg8: memref<32x16xbf16, #tpu.memory_space<vmem>>, %arg9: memref<1x16xf32, #tpu.memory_space<vmem>>, %arg10: memref<1x16xf32, #tpu.memory_space<vmem>>, %arg11: memref<1x1xf32, #tpu.memory_space<vmem>>, %arg12: memref<1x1x8xf32, #tpu.memory_space<vmem>>) attributes {dimension_semantics = [#tpu.dimension_semantics<parallel>], iteration_bounds = array<i64: 1>, scalar_prefetch = 0 : i64, scratch_operands = 0 : i64, tpu.core_type = #tpu.core_type<tc>, window_params = [{transform_indices = @transform_0, window_bounds = array<i64: 8, 100>}, {transform_indices = @transform_1, window_bounds = array<i64: 8, 16>}, {pipeline_mode = #tpu.pipeline_mode<synchronous>, transform_indices = @transform_2, window_bounds = array<i64: 100, 64>}, {pipeline_mode = #tpu.pipeline_mode<synchronous>, transform_indices = @transform_3, window_bounds = array<i64: 16, 64>}, {pipeline_mode = #tpu.pipeline_mode<synchronous>, transform_indices = @transform_4, window_bounds = array<i64: 1, 64>}, {pipeline_mode = #tpu.pipeline_mode<synchronous>, transform_indices = @transform_5, window_bounds = array<i64: 64, 32>}, {pipeline_mode = #tpu.pipeline_mode<synchronous>, transform_indices = @transform_6, window_bounds = array<i64: 1, 32>}, {pipeline_mode = #tpu.pipeline_mode<synchronous>, transform_indices = @transform_7, window_bounds = array<i64: 32, 16>}, {pipeline_mode = #tpu.pipeline_mode<synchronous>, transform_indices = @transform_8, window_bounds = array<i64: 1, 16>}, {pipeline_mode = #tpu.pipeline_mode<synchronous>, transform_indices = @transform_9, window_bounds = array<i64: 1, 16>}, {pipeline_mode = #tpu.pipeline_mode<synchronous>, transform_indices = @transform_10, window_bounds = array<i64: 1, 1>}, {transform_indices = @transform_11, window_bounds = array<i64: 1, 1, 8>}]} {
    %c0 = arith.constant 0 : index
    %c0_0 = arith.constant 0 : index
    %0 = vector.load %arg1[%c0, %c0_0] : memref<8x100xf32, #tpu.memory_space<vmem>>, vector<8x100xf32>
    %1 = arith.truncf %0 : vector<8x100xf32> to vector<8x100xbf16>
    %c0_1 = arith.constant 0 : index
    %c0_2 = arith.constant 0 : index
    %2 = vector.load %arg3[%c0_1, %c0_2] : memref<100x64xbf16, #tpu.memory_space<vmem>>, vector<100x64xbf16>
    %cst = arith.constant dense<0.000000e+00> : vector<8x64xf32>
    %3 = tpu.matmul %1, %2, %cst {dimension_numbers = #tpu.dot_dimension_numbers<[1], [0], [0], [1], [0, 0, 1, 1], [], []>} : vector<8x100xbf16>, vector<100x64xbf16>, vector<8x64xf32> -> vector<8x64xf32>
    %c0_3 = arith.constant 0 : index
    %c0_4 = arith.constant 0 : index
    %4 = vector.load %arg2[%c0_3, %c0_4] : memref<8x16xf32, #tpu.memory_space<vmem>>, vector<8x16xf32>
    %5 = arith.truncf %4 : vector<8x16xf32> to vector<8x16xbf16>
    %c0_5 = arith.constant 0 : index
    %c0_6 = arith.constant 0 : index
    %6 = vector.load %arg4[%c0_5, %c0_6] : memref<16x64xbf16, #tpu.memory_space<vmem>>, vector<16x64xbf16>
    %cst_7 = arith.constant dense<0.000000e+00> : vector<8x64xf32>
    %7 = tpu.matmul %5, %6, %cst_7 {dimension_numbers = #tpu.dot_dimension_numbers<[1], [0], [0], [1], [0, 0, 1, 1], [], []>} : vector<8x16xbf16>, vector<16x64xbf16>, vector<8x64xf32> -> vector<8x64xf32>
    %8 = arith.addf %3, %7 : vector<8x64xf32>
    %c0_8 = arith.constant 0 : index
    %c0_9 = arith.constant 0 : index
    %9 = vector.load %arg5[%c0_8, %c0_9] : memref<1x64xf32, #tpu.memory_space<vmem>>, vector<1x64xf32>
    %10 = vector.broadcast %9 : vector<1x64xf32> to vector<8x64xf32>
    %11 = arith.addf %8, %10 : vector<8x64xf32>
    %cst_10 = arith.constant 0.000000e+00 : f32
    %12 = vector.broadcast %cst_10 : f32 to vector<8x64xf32>
    %13 = arith.maximumf %11, %12 : vector<8x64xf32>
    %14 = arith.truncf %13 : vector<8x64xf32> to vector<8x64xbf16>
    %c0_11 = arith.constant 0 : index
    %c0_12 = arith.constant 0 : index
    %15 = vector.load %arg6[%c0_11, %c0_12] : memref<64x32xbf16, #tpu.memory_space<vmem>>, vector<64x32xbf16>
    %cst_13 = arith.constant dense<0.000000e+00> : vector<8x32xf32>
    %16 = tpu.matmul %14, %15, %cst_13 {dimension_numbers = #tpu.dot_dimension_numbers<[1], [0], [0], [1], [0, 0, 1, 1], [], []>} : vector<8x64xbf16>, vector<64x32xbf16>, vector<8x32xf32> -> vector<8x32xf32>
    %c0_14 = arith.constant 0 : index
    %c0_15 = arith.constant 0 : index
    %17 = vector.load %arg7[%c0_14, %c0_15] : memref<1x32xf32, #tpu.memory_space<vmem>>, vector<1x32xf32>
    %18 = vector.broadcast %17 : vector<1x32xf32> to vector<8x32xf32>
    %19 = arith.addf %16, %18 : vector<8x32xf32>
    %cst_16 = arith.constant 0.000000e+00 : f32
    %20 = vector.broadcast %cst_16 : f32 to vector<8x32xf32>
    %21 = arith.maximumf %19, %20 : vector<8x32xf32>
    %22 = arith.truncf %21 : vector<8x32xf32> to vector<8x32xbf16>
    %c0_17 = arith.constant 0 : index
    %c0_18 = arith.constant 0 : index
    %23 = vector.load %arg8[%c0_17, %c0_18] : memref<32x16xbf16, #tpu.memory_space<vmem>>, vector<32x16xbf16>
    %cst_19 = arith.constant dense<0.000000e+00> : vector<8x16xf32>
    %24 = tpu.matmul %22, %23, %cst_19 {dimension_numbers = #tpu.dot_dimension_numbers<[1], [0], [0], [1], [0, 0, 1, 1], [], []>} : vector<8x32xbf16>, vector<32x16xbf16>, vector<8x16xf32> -> vector<8x16xf32>
    %c0_20 = arith.constant 0 : index
    %c0_21 = arith.constant 0 : index
    %25 = vector.load %arg9[%c0_20, %c0_21] : memref<1x16xf32, #tpu.memory_space<vmem>>, vector<1x16xf32>
    %26 = vector.broadcast %25 : vector<1x16xf32> to vector<8x16xf32>
    %27 = arith.addf %24, %26 : vector<8x16xf32>
    %cst_22 = arith.constant 0.000000e+00 : f32
    %28 = vector.broadcast %cst_22 : f32 to vector<8x16xf32>
    %29 = arith.maximumf %27, %28 : vector<8x16xf32>
    %c0_23 = arith.constant 0 : index
    %c0_24 = arith.constant 0 : index
    %30 = vector.load %arg10[%c0_23, %c0_24] : memref<1x16xf32, #tpu.memory_space<vmem>>, vector<1x16xf32>
    %cst_25 = arith.constant dense<0.000000e+00> : vector<1x8xf32>
    %31 = tpu.matmul %30, %29, %cst_25 {dimension_numbers = #tpu.dot_dimension_numbers<[1], [1], [0], [0], [0, 0, 1, 0], [], []>} : vector<1x16xf32>, vector<8x16xf32>, vector<1x8xf32> -> vector<1x8xf32>
    %c0_26 = arith.constant 0 : index
    %c0_27 = arith.constant 0 : index
    %32 = vector.load %arg11[%c0_26, %c0_27] : memref<1x1xf32, #tpu.memory_space<vmem>>, vector<1x1xf32>
    %33 = vector.broadcast %32 : vector<1x1xf32> to vector<1x8xf32>
    %34 = arith.addf %31, %33 : vector<1x8xf32>
    %35 = vector.shape_cast %34 : vector<1x8xf32> to vector<1x1x8xf32>
    %c0_28 = arith.constant 0 : index
    %c0_29 = arith.constant 0 : index
    %c0_30 = arith.constant 0 : index
    %36 = vector.load %arg12[%c0_28, %c0_29, %c0_30] : memref<1x1x8xf32, #tpu.memory_space<vmem>>, vector<1x1x8xf32>
    tpu.vector_store %arg12[%c0_28, %c0_29, %c0_30], %35 {strides = array<i32>} : memref<1x1x8xf32, #tpu.memory_space<vmem>>, vector<1x1x8xf32>,
    return
  }
  func.func @transform_0(%arg0: i32) -> (i32, i32) {
    %c0_i32 = arith.constant 0 : i32
    %c0_i32_0 = arith.constant 0 : i32
    return %arg0, %c0_i32 : i32, i32
  }
  func.func @transform_1(%arg0: i32) -> (i32, i32) {
    %c0_i32 = arith.constant 0 : i32
    %c0_i32_0 = arith.constant 0 : i32
    return %arg0, %c0_i32 : i32, i32
  }
  func.func @transform_2(%arg0: i32) -> (i32, i32) {
    %c0_i32 = arith.constant 0 : i32
    %c0_i32_0 = arith.constant 0 : i32
    %c0_i32_1 = arith.constant 0 : i32
    return %c0_i32, %c0_i32_0 : i32, i32
  }
  func.func @transform_3(%arg0: i32) -> (i32, i32) {
    %c0_i32 = arith.constant 0 : i32
    %c0_i32_0 = arith.constant 0 : i32
    %c0_i32_1 = arith.constant 0 : i32
    return %c0_i32, %c0_i32_0 : i32, i32
  }
  func.func @transform_4(%arg0: i32) -> (i32, i32) {
    %c0_i32 = arith.constant 0 : i32
    %c0_i32_0 = arith.constant 0 : i32
    %c0_i32_1 = arith.constant 0 : i32
    return %c0_i32, %c0_i32_0 : i32, i32
  }
  func.func @transform_5(%arg0: i32) -> (i32, i32) {
    %c0_i32 = arith.constant 0 : i32
    %c0_i32_0 = arith.constant 0 : i32
    %c0_i32_1 = arith.constant 0 : i32
    return %c0_i32, %c0_i32_0 : i32, i32
  }
  func.func @transform_6(%arg0: i32) -> (i32, i32) {
    %c0_i32 = arith.constant 0 : i32
    %c0_i32_0 = arith.constant 0 : i32
    %c0_i32_1 = arith.constant 0 : i32
    return %c0_i32, %c0_i32_0 : i32, i32
  }
  func.func @transform_7(%arg0: i32) -> (i32, i32) {
    %c0_i32 = arith.constant 0 : i32
    %c0_i32_0 = arith.constant 0 : i32
    %c0_i32_1 = arith.constant 0 : i32
    return %c0_i32, %c0_i32_0 : i32, i32
  }
  func.func @transform_8(%arg0: i32) -> (i32, i32) {
    %c0_i32 = arith.constant 0 : i32
    %c0_i32_0 = arith.constant 0 : i32
    %c0_i32_1 = arith.constant 0 : i32
    return %c0_i32, %c0_i32_0 : i32, i32
  }
  func.func @transform_9(%arg0: i32) -> (i32, i32) {
    %c0_i32 = arith.constant 0 : i32
    %c0_i32_0 = arith.constant 0 : i32
    %c0_i32_1 = arith.constant 0 : i32
    return %c0_i32, %c0_i32_0 : i32, i32
  }
  func.func @transform_10(%arg0: i32) -> (i32, i32) {
    %c0_i32 = arith.constant 0 : i32
    %c0_i32_0 = arith.constant 0 : i32
    %c0_i32_1 = arith.constant 0 : i32
    return %c0_i32, %c0_i32_0 : i32, i32
  }
  func.func @transform_11(%arg0: i32) -> (i32, i32, i32) {
    %c0_i32 = arith.constant 0 : i32
    %c0_i32_0 = arith.constant 0 : i32
    %c0_i32_1 = arith.constant 0 : i32
    return %arg0, %c0_i32, %c0_i32_0 : i32, i32, i32
  }
}

</mosaic_0001>

<llo_original>
// kernel: tpu_custom_call.1
$region0: #{tpu_custom_call.1}
  #allocation0 [shape = 'u32[]', space=smem, size = 0x4, offset = 0x4, fixed_abs, tag = 'smem constant byte address 0x4 - core index']
  #allocation1 [shape = 'u32[72,128]{1,0:T(1,128)}', space=vmem, size = 0x9000, scoped, tag = 'internal scratch']
  #allocation2 [shape = 'f32[1,1]{1,0:T(1,128)S(1)}', space=vmem, size = 0x200, scoped, tag = 'scoped memory for tpu_custom_call.1']
  %s0 = inlined_call_operand.vmem [shape: f32[8,100], index: 0, kind: input, shape index: {}]
  %s1 = inlined_call_operand.vmem [shape: f32[8,16], index: 1, kind: input, shape index: {}]
  %s2 = inlined_call_operand.vmem [shape: bf16[100,64], index: 2, kind: input, shape index: {}]
  %s3 = inlined_call_operand.vmem [shape: bf16[16,64], index: 3, kind: input, shape index: {}]
  %s4 = inlined_call_operand.vmem [shape: f32[1,64], index: 4, kind: input, shape index: {}]
  %s5 = inlined_call_operand.vmem [shape: bf16[64,32], index: 5, kind: input, shape index: {}]
  %s6 = inlined_call_operand.vmem [shape: f32[1,32], index: 6, kind: input, shape index: {}]
  %s7 = inlined_call_operand.vmem [shape: bf16[32,16], index: 7, kind: input, shape index: {}]
  %s8 = inlined_call_operand.vmem [shape: f32[1,16], index: 8, kind: input, shape index: {}]
  %s9 = inlined_call_operand.vmem [shape: f32[1,16], index: 9, kind: input, shape index: {}]
  %s10 = inlined_call_operand.<no memory space> [shape: f32[1,1], index: 10, kind: input, shape index: {}]
  %s11 = inlined_call_operand.hbm [shape: f32[1,1,8], index: 11, kind: output, shape index: {}]
  %s12 = sld [smem:[#allocation0]]
  $region54: #{tpu_custom_call.1} parent=0
    _
  %s14 = ssub.s32 1, %s12
  %s15 = scalar_select 0, %s14, %s12
  %v16 = vstv %s10
  %17 = vst [vmem:[#allocation2] sm:$0x1] %v16
  $region1: #{tpu_custom_call.1} parent=0
    #allocation3 [shape = 'u8[512]{0}', space=vmem, size = 0x400, scoped, tag = 'output window, operand 0, single buffered']
    #allocation4 [shape = 's32[1]{0}', space=sflag, size = 0x4, scoped, tag = 'scoped memory for tpu_custom_call.1']
    %18 = vsyncpa [#allocation4], 0
    // Predicated region
    $region2: #{tpu_custom_call.1} parent=1 // pred_check
      _
    $region3: #{tpu_custom_call.1} parent=1 // pred_check_branch
      %20 = sbr.rel (0) target = $region5
    $region4: #{tpu_custom_call.1} parent=1 // pred_region
      _
    $region5: #{tpu_custom_call.1} parent=1 // pred_fallthru
      _
    // Predicated region
    $region6: #{tpu_custom_call.1} parent=1 // pred_check
      _
    $region7: #{tpu_custom_call.1} parent=1 // pred_check_branch
      %22 = sbr.rel (0) target = $region9
    $region8: #{tpu_custom_call.1} parent=1 // pred_region
      _
    $region9: #{tpu_custom_call.1} parent=1 // pred_fallthru
      _
    // Predicated region
    $region10: #{tpu_custom_call.1} parent=1 // pred_check
      _
    $region11: #{tpu_custom_call.1} parent=1 // pred_check_branch
      %24 = sbr.rel (0) target = $region13
    $region12: #{tpu_custom_call.1} parent=1 // pred_region
      _
    $region13: #{tpu_custom_call.1} parent=1 // pred_fallthru
      _
    // Predicated region
    $region14: #{tpu_custom_call.1} parent=1 // pred_check
      _
    $region15: #{tpu_custom_call.1} parent=1 // pred_check_branch
      %26 = sbr.rel (0) target = $region17
    $region16: #{tpu_custom_call.1} parent=1 // pred_region
      _
    $region17: #{tpu_custom_call.1} parent=1 // pred_fallthru
      _
    // Predicated region
    $region18: #{tpu_custom_call.1} parent=1 // pred_check
      _
    $region19: #{tpu_custom_call.1} parent=1 // pred_check_branch
      %28 = sbr.rel (0) target = $region21
    $region20: #{tpu_custom_call.1} parent=1 // pred_region
      _
    $region21: #{tpu_custom_call.1} parent=1 // pred_fallthru
      _
    // Predicated region
    $region22: #{tpu_custom_call.1} parent=1 // pred_check
      _
    $region23: #{tpu_custom_call.1} parent=1 // pred_check_branch
      %30 = sbr.rel (0) target = $region25
    $region24: #{tpu_custom_call.1} parent=1 // pred_region
      _
    $region25: #{tpu_custom_call.1} parent=1 // pred_fallthru
      _
    // Predicated region
    $region26: #{tpu_custom_call.1} parent=1 // pred_check
      _
    $region27: #{tpu_custom_call.1} parent=1 // pred_check_branch
      %32 = sbr.rel (0) target = $region29
    $region28: #{tpu_custom_call.1} parent=1 // pred_region
      _
    $region29: #{tpu_custom_call.1} parent=1 // pred_fallthru
      _
    // Predicated region
    $region30: #{tpu_custom_call.1} parent=1 // pred_check
      _
    $region31: #{tpu_custom_call.1} parent=1 // pred_check_branch
      %34 = sbr.rel (0) target = $region33
    $region32: #{tpu_custom_call.1} parent=1 // pred_region
      _
    $region33: #{tpu_custom_call.1} parent=1 // pred_fallthru
      _
    // Predicated region
    $region34: #{tpu_custom_call.1} parent=1 // pred_check
      _
    $region35: #{tpu_custom_call.1} parent=1 // pred_check_branch
      %36 = sbr.rel (0) target = $region37
    $region36: #{tpu_custom_call.1} parent=1 // pred_region
      _
    $region37: #{tpu_custom_call.1} parent=1 // pred_fallthru
      _
    // Predicated region
    $region38: #{tpu_custom_call.1} parent=1 // pred_check
      _
    $region39: #{tpu_custom_call.1} parent=1 // pred_check_branch
      %38 = sbr.rel (0) target = $region41
    $region40: #{tpu_custom_call.1} parent=1 // pred_region
      _
    $region41: #{tpu_custom_call.1} parent=1 // pred_fallthru
      _
    // Predicated region
    $region42: #{tpu_custom_call.1} parent=1 // pred_check
      _
    $region43: #{tpu_custom_call.1} parent=1 // pred_check_branch
      %40 = sbr.rel (0) target = $region45
    $region44: #{tpu_custom_call.1} parent=1 // pred_region
      _
    $region45: #{tpu_custom_call.1} parent=1 // pred_fallthru
      _
    %v42 = vld [vmem:[%s0] sm:$0xff]
    %v43 = vpack.c.bf16 %v42, %v42
    %v44 = vld [vmem:[%s2] sm:$0xf]
    %v45 = vld [vmem:[%s2 + $0x4] sm:$0xf]
    %v46 = vld [vmem:[%s2 + $0x8] sm:$0xf]
    %v47 = vld [vmem:[%s2 + $0xc] sm:$0xf]
    %v48 = vld [vmem:[%s2 + $0x10] sm:$0xf]
    %v49 = vld [vmem:[%s2 + $0x14] sm:$0xf]
    %v50 = vld [vmem:[%s2 + $0x18] sm:$0xf]
    %v51 = vld [vmem:[%s2 + $0x1c] sm:$0xf]
    %v52 = vld [vmem:[%s2 + $0x20] sm:$0xf]
    %v53 = vld [vmem:[%s2 + $0x24] sm:$0xf]
    %v54 = vld [vmem:[%s2 + $0x28] sm:$0xf]
    %v55 = vld [vmem:[%s2 + $0x2c] sm:$0xf]
    %v56 = vld [vmem:[%s2 + $0x30] sm:$0x3]
    %v57 = vld [vmem:[%s1] sm:$0xff]
    %v58 = vpack.c.bf16 %v57, %v57
    %v59 = vld [vmem:[%s3] sm:$0xf]
    %v60 = vld [vmem:[%s3 + $0x4] sm:$0xf]
    %v63 = vunpack.c.l.b16 %v59
    %v64 = vunpack.c.l.b16 %v60
    %v65 = vpack.c.b16 %v64, %v63
    %vm67 = vcmask 130048
    %v69 = vsel %vm67, %v58, 0
    %71 = vmatpush.bf16.msra.mxu0 0
    %72 = vmatpush.bf16.msra.mxu0 0
    %73 = vmatpush.bf16.msra.mxu0 0
    %74 = vmatpush.bf16.msra.mxu0 0
    %75 = vmatpush.bf16.msra.mxu0 0
    %76 = vmatpush.bf16.msra.mxu0 0
    %77 = vmatpush.bf16.msra.mxu0 0
    %78 = vmatpush.bf16.msra.mxu0 %v65
    %79 = vmatmul.bf16.gmra.mxu0 %v69
    %v80 = vpop.f32.mrf.mxu0
    %v81 = vadd.f32 0.0, %v80
    %v82 = vpop.f32.mrf.mxu0
    %83 = vdwg.mxu0
    %v97 = vunpack.c.l.b16 %v44
    %v98 = vunpack.c.l.b16 %v45
    %v99 = vunpack.c.l.b16 %v46
    %v100 = vunpack.c.l.b16 %v47
    %v101 = vunpack.c.l.b16 %v48
    %v102 = vunpack.c.l.b16 %v49
    %v103 = vunpack.c.l.b16 %v50
    %v104 = vunpack.c.l.b16 %v51
    %v105 = vunpack.c.l.b16 %v52
    %v106 = vunpack.c.l.b16 %v53
    %v107 = vunpack.c.l.b16 %v54
    %v108 = vunpack.c.l.b16 %v55
    %v109 = vunpack.c.l.b16 %v56
    %v110 = vpack.c.b16 %v98, %v97
    %v111 = vpack.c.b16 %v100, %v99
    %v112 = vpack.c.b16 %v102, %v101
    %v113 = vpack.c.b16 %v104, %v103
    %v114 = vpack.c.b16 %v106, %v105
    %v115 = vpack.c.b16 %v108, %v107
    %v116 = vpack.c.b16 %v109, %v109
    %vm123 = vcmask 818176
    %v125 = vsel %vm123, %v43, 0
    %vm127 = vcmask 1041408
    %v129 = vsel %vm127, %v116, 0
    %131 = vmatpush.bf16.msra.mxu0 0
    %132 = vmatpush.bf16.msra.mxu0 %v129
    %133 = vmatpush.bf16.msra.mxu0 %v115
    %134 = vmatpush.bf16.msra.mxu0 %v114
    %135 = vmatpush.bf16.msra.mxu0 %v113
    %136 = vmatpush.bf16.msra.mxu0 %v112
    %137 = vmatpush.bf16.msra.mxu0 %v111
    %138 = vmatpush.bf16.msra.mxu0 %v110
    %139 = vmatmul.bf16.gmra.mxu0 %v125
    %v140 = vpop.f32.mrf.mxu0
    %v141 = vadd.f32 %v81, %v140
    %v142 = vpop.f32.mrf.mxu0
    %143 = vdwg.mxu0
    %v144 = vld [vmem:[%s4] sm:$0x1]
    %v146 = vperm.slane %v144, 0
    %v148 = vadd.f32 %v141, %v146
    %v149 = vmax.f32 %v148, 0.0
    %v150 = vpack.c.bf16 %v149, %v149
    %v151 = vld [vmem:[%s5] sm:$0xf]
    %v152 = vld [vmem:[%s5 + $0x4] sm:$0xf]
    %v153 = vld [vmem:[%s5 + $0x8] sm:$0xf]
    %v154 = vld [vmem:[%s5 + $0xc] sm:$0xf]
    %v155 = vld [vmem:[%s5 + $0x10] sm:$0xf]
    %v156 = vld [vmem:[%s5 + $0x14] sm:$0xf]
    %v157 = vld [vmem:[%s5 + $0x18] sm:$0xf]
    %v158 = vld [vmem:[%s5 + $0x1c] sm:$0xf]
    %v159 = vld [vmem:[%s6] sm:$0x1]
    %v161 = vperm.slane %v159, 0
    %v171 = vunpack.c.l.b16 %v151
    %v172 = vunpack.c.l.b16 %v152
    %v173 = vunpack.c.l.b16 %v153
    %v174 = vunpack.c.l.b16 %v154
    %v175 = vunpack.c.l.b16 %v155
    %v176 = vunpack.c.l.b16 %v156
    %v177 = vunpack.c.l.b16 %v157
    %v178 = vunpack.c.l.b16 %v158
    %v179 = vpack.c.b16 %v172, %v171
    %v180 = vpack.c.b16 %v174, %v173
    %v181 = vpack.c.b16 %v176, %v175
    %v182 = vpack.c.b16 %v178, %v177
    %vm187 = vcmask 523264
    %v189 = vsel %vm187, %v150, 0
    %191 = vmatpush.bf16.msra.mxu0 0
    %192 = vmatpush.bf16.msra.mxu0 0
    %193 = vmatpush.bf16.msra.mxu0 0
    %194 = vmatpush.bf16.msra.mxu0 0
    %195 = vmatpush.bf16.msra.mxu0 %v182
    %196 = vmatpush.bf16.msra.mxu0 %v181
    %197 = vmatpush.bf16.msra.mxu0 %v180
    %198 = vmatpush.bf16.msra.mxu0 %v179
    %199 = vmatmul.bf16.gmra.mxu0 %v189
    %v200 = vpop.f32.mrf.mxu0
    %v201 = vadd.f32 %v161, %v200
    %v202 = vpop.f32.mrf.mxu0
    %203 = vdwg.mxu0
    %v204 = vmax.f32 %v201, 0.0
    %v205 = vpack.c.bf16 %v204, %v204
    %v206 = vld [vmem:[%s7] sm:$0xf]
    %v207 = vld [vmem:[%s7 + $0x4] sm:$0xf]
    %v208 = vld [vmem:[%s7 + $0x8] sm:$0xf]
    %v209 = vld [vmem:[%s7 + $0xc] sm:$0xf]
    %v210 = vld [vmem:[%s8] sm:$0x1]
    %v212 = vperm.slane %v210, 0
    %v218 = vunpack.c.l.b16 %v206
    %v219 = vunpack.c.l.b16 %v207
    %v220 = vunpack.c.l.b16 %v208
    %v221 = vunpack.c.l.b16 %v209
    %v222 = vpack.c.b16 %v219, %v218
    %v223 = vpack.c.b16 %v221, %v220
    %vm226 = vcmask 261120
    %v228 = vsel %vm226, %v205, 0
    %230 = vmatpush.bf16.msra.mxu0 0
    %231 = vmatpush.bf16.msra.mxu0 0
    %232 = vmatpush.bf16.msra.mxu0 0
    %233 = vmatpush.bf16.msra.mxu0 0
    %234 = vmatpush.bf16.msra.mxu0 0
    %235 = vmatpush.bf16.msra.mxu0 0
    %236 = vmatpush.bf16.msra.mxu0 %v223
    %237 = vmatpush.bf16.msra.mxu0 %v222
    %238 = vmatmul.bf16.gmra.mxu0 %v228
    %v239 = vpop.f32.mrf.mxu0
    %v240 = vadd.f32 %v212, %v239
    %v241 = vpop.f32.mrf.mxu0
    %242 = vdwg.mxu0
    %v243 = vmax.f32 %v240, 0.0
    %v244 = vld [vmem:[%s9] sm:$0x1]
    %v245 = vld [vmem:[#allocation2] sm:$0x1]
    %247 = vset.pattern.permute.xlu0 0
    %248 = vperm.xlu0 %247, %v245
    %v249 = vpop.permute.xlu0 %248
    %v251 = vperm.slane %v249, 0
    %v253 = vsel %vm67, %v244, 0
    %v256 = vsel %vm67, %v243, 0
    %258 = vmatpush.xpose.msra.mxu0 0.0
    %259 = vmatpush.xpose.msra.mxu0 0.0
    %260 = vmatpush.xpose.msra.mxu0 0.0
    %261 = vmatpush.xpose.msra.mxu0 0.0
    %262 = vmatpush.xpose.msra.mxu0 0.0
    %263 = vmatpush.xpose.msra.mxu0 0.0
    %264 = vmatpush.xpose.msra.mxu0 0.0
    %265 = vmatpush.xpose.msra.mxu0 0.0
    %266 = vmatpush.xpose.msra.mxu0 0.0
    %267 = vmatpush.xpose.msra.mxu0 0.0
    %268 = vmatpush.xpose.msra.mxu0 0.0
    %269 = vmatpush.xpose.msra.mxu0 0.0
    %270 = vmatpush.xpose.msra.mxu0 0.0
    %271 = vmatpush.xpose.msra.mxu0 0.0
    %272 = vmatpush.xpose.msra.mxu0 0.0
    %273 = vmatpush.xpose.msra.mxu0 %v256
    %274 = vmatmul.f32.gmra.mxu0 %v253
    %v275 = vpop.f32.mrf.mxu0
    %v276 = vadd.f32 %v251, %v275
    %277 = vdwg.mxu0
    %vm278 = vcmask 57344
    %279 = vst.msk [vmem:[#allocation3] sm:$0x1] %vm278, %v276
    // Predicated region
    $region46: #{tpu_custom_call.1} parent=1 // pred_check
      _
    $region47: #{tpu_custom_call.1} parent=1 // pred_check_branch
      %281 = sbr.rel (0) target = $region49
    $region48: #{tpu_custom_call.1} parent=1 // pred_region
      %283 = vsyncadd [#allocation4], 0
      %s285 = sshll.u32 [#allocation3], 4
      %s286 = int_to_ptr.vmem [resolvable:$true] %s285
      %s287 = sshll.u32 %s11, 4
      %s288 = int_to_ptr.hbm [resolvable:$true] %s287
      %290 = dma.vmem_to_hbm [thread:$0]  %s286, 16, %s288, [#allocation4]
    $region49: #{tpu_custom_call.1} parent=1 // pred_fallthru
      _
    // Predicated region
    $region50: #{tpu_custom_call.1} parent=1 // pred_check
      _
    $region51: #{tpu_custom_call.1} parent=1 // pred_check_branch
      %292 = sbr.rel (0) target = $region53
    $region52: #{tpu_custom_call.1} parent=1 // pred_region
      %294 = dma.done [#allocation4], 16
    $region53: #{tpu_custom_call.1} parent=1 // pred_fallthru
      _
    %295 = vsyncpa [#allocation4], 1

</llo_original>
